<compile_context>
chip_gen: v7x
topology: tpu7x:2x2x1
jax: 0.10.0
libtpu: 0.0.40
codegen_flags: <defaults>
</compile_context>

<pallas_src>
import jax
import jax.numpy as jnp
from jax.experimental import pallas as pl
from jax.experimental.pallas import tpu as pltpu


def dueling_kernel(x_ref, w1_ref, b1_ref, wh_ref, bh_ref, q_ref, s_ref):
    """One batch tile, batch on lanes.

    x_ref : (n_state, Btile)          input tile (X^T)
    w1_ref: (n_hidden, n_state)       l1.weight  (PyTorch layout)
    b1_ref: (n_hidden, 1)             l1.bias
    wh_ref: (n_output+1, n_hidden)    folded head weight [W3 + 1*W4 ; sum_j W3]
    bh_ref: (n_output+1, 1)           folded head bias   [b3 + b4  ; sum(b3)]
    q_ref : (n_output, Btile)         V3 + V4 (pre mean-subtraction), transposed
    s_ref : (1, Btile)                per-example sum over outputs of V3
    """
    n_output = q_ref.shape[0]

    # Layer 1 + ReLU  (single small-K MXU matmul; VPU relu)
    v1 = jnp.dot(w1_ref[...], x_ref[...],
                 preferred_element_type=jnp.float32) + b1_ref[...]
    v2 = jnp.maximum(v1, 0.0)                             # (n_hidden, Btile)

    # Single folded head matmul: rows 0..n_output-1 = V3+V4, last row = rowsum(V3)
    head = jnp.dot(wh_ref[...], v2,
                   preferred_element_type=jnp.float32) + bh_ref[...]
    q_ref[...] = head[:n_output, :]
    s_ref[...] = head[n_output:, :]


def dueling_forward(x, w1, b1, w3, b3, w4, b4, *, block_b=128):
    """x: (B, n_state); weights in PyTorch layout (out, in), biases (out,)."""
    B, n_state = x.shape
    n_hidden = w1.shape[0]
    n_output = w3.shape[0]

    # ---- wrapper-side algebraic head fold (feedback #1) ----
    w_head = jnp.concatenate(
        [w3 + jnp.broadcast_to(w4, w3.shape),          # V3 + V4 path
         jnp.sum(w3, axis=0, keepdims=True)], axis=0)  # rowsum(V3) path
    b_head = jnp.concatenate([b3 + b4, jnp.sum(b3)[None]])[:, None]
    b1_col = b1[:, None]

    # ---- lane-dense layout: batch on the lane axis (feedback #2) ----
    nb = pl.cdiv(B, block_b)
    b_padded = nb * block_b
    x_t = x.T                                           # (n_state, B)
    if b_padded != B:
        x_t = jnp.pad(x_t, ((0, 0), (0, b_padded - B)))

    def resident(shape):
        # Full-array block, constant index -> DMA'd once, stays VMEM-resident.
        return pl.BlockSpec(shape, lambda i: (0, 0))

    q_t, s_t = pl.pallas_call(
        dueling_kernel,
        grid_spec=pltpu.PrefetchScalarGridSpec(
            num_scalar_prefetch=0,
            grid=(nb,),
            in_specs=[
                pl.BlockSpec((n_state, block_b), lambda i: (0, i)),   # X^T tile
                resident((n_hidden, n_state)),                        # W1
                resident((n_hidden, 1)),                              # b1
                resident((n_output + 1, n_hidden)),                   # folded W
                resident((n_output + 1, 1)),                          # folded b
            ],
            out_specs=[
                pl.BlockSpec((n_output, block_b), lambda i: (0, i)),  # (V3+V4)^T
                pl.BlockSpec((1, block_b), lambda i: (0, i)),         # rowsum(V3)
            ],
        ),
        out_shape=[
            jax.ShapeDtypeStruct((n_output, b_padded), jnp.float32),
            jax.ShapeDtypeStruct((1, b_padded), jnp.float32),
        ],
        compiler_params=pltpu.CompilerParams(
            # Batch grid is independent per step (mean decoupled) -> shard it
            # across the 2 TCs on v7x; harmless on v5e/v6e.
            dimension_semantics=("parallel",),
            # Tiles here are KB-scale; this limit leaves ample headroom even on
            # v7x's 64 MiB VMEM. Re-budget if block_b is raised into the 1000s.
            vmem_limit_bytes=32 * 1024 * 1024,
        ),
    )(x_t, w1, b1_col, w_head, b_head)

    # ---- decoupled global mean (feedback #3): one fused XLA epilogue ----
    v3_mean = jnp.sum(s_t[:, :B]) / (B * n_output)
    return (q_t[:, :B] - v3_mean).T                     # (B, n_output)


def init_params(key, n_state, n_hidden, n_output):
    """Deterministic init mimicking nn.Linear default U(-1/sqrt(fan_in), +)."""
    ks = jax.random.split(key, 6)

    def u(k, shape, fan_in):
        bound = 1.0 / jnp.sqrt(jnp.float32(fan_in))
        return jax.random.uniform(k, shape, jnp.float32, -bound, bound)

    w1 = u(ks[0], (n_hidden, n_state), n_state)   # l1.weight
    b1 = u(ks[1], (n_hidden,), n_state)           # l1.bias
    w3 = u(ks[2], (n_output, n_hidden), n_hidden) # l3.weight
    b3 = u(ks[3], (n_output,), n_hidden)          # l3.bias
    w4 = u(ks[4], (1, n_hidden), n_hidden)        # l4.weight
    b4 = u(ks[5], (1,), n_hidden)                 # l4.bias
    return w1, b1, w3, b3, w4, b4


def reference_forward(x, w1, b1, w3, b3, w4, b4):
    v2 = jnp.maximum(x @ w1.T + b1, 0.0)
    v3 = v2 @ w3.T + b3
    v4 = v2 @ w4.T + b4                           # (B, 1), broadcasts
    return v3 + v4 - jnp.mean(v3)


if __name__ == "__main__":
    # MountainCar sizes: 2 observations, 3 actions; modest batch to exercise
    # the batch grid (2 tiles of 128).
    B, n_state, n_hidden, n_output = 256, 2, 32, 3

    key = jax.random.PRNGKey(0)
    kx, kp = jax.random.split(key)
    x = jax.random.normal(kx, (B, n_state), dtype=jnp.float32)
    params = init_params(kp, n_state, n_hidden, n_output)

    out = jax.block_until_ready(dueling_forward(x, *params))
    ref = reference_forward(x, *params)

    assert out.shape == (B, n_output)
    assert jnp.allclose(out, ref, atol=2e-4, rtol=2e-4), float(
        jnp.max(jnp.abs(out - ref)))

    print("KERNEL_OK")
</pallas_src>

<mosaic_0001>
module attributes {stable_mosaic.version = 11 : i64} {
  func.func @dueling_kernel(%arg0: i32, %arg1: memref<2x128xf32, #tpu.memory_space<vmem>>, %arg2: memref<32x2xf32, #tpu.memory_space<vmem>>, %arg3: memref<32x1xf32, #tpu.memory_space<vmem>>, %arg4: memref<4x32xf32, #tpu.memory_space<vmem>>, %arg5: memref<4x1xf32, #tpu.memory_space<vmem>>, %arg6: memref<3x128xf32, #tpu.memory_space<vmem>>, %arg7: memref<1x128xf32, #tpu.memory_space<vmem>>) attributes {dimension_semantics = [#tpu.dimension_semantics<parallel>], iteration_bounds = array<i64: 2>, scalar_prefetch = 0 : i64, scratch_operands = 0 : i64, tpu.core_type = #tpu.core_type<tc>, window_params = [{transform_indices = @transform_0, window_bounds = array<i64: 2, 128>}, {pipeline_mode = #tpu.pipeline_mode<synchronous>, transform_indices = @transform_1, window_bounds = array<i64: 32, 2>}, {pipeline_mode = #tpu.pipeline_mode<synchronous>, transform_indices = @transform_2, window_bounds = array<i64: 32, 1>}, {pipeline_mode = #tpu.pipeline_mode<synchronous>, transform_indices = @transform_3, window_bounds = array<i64: 4, 32>}, {pipeline_mode = #tpu.pipeline_mode<synchronous>, transform_indices = @transform_4, window_bounds = array<i64: 4, 1>}, {transform_indices = @transform_5, window_bounds = array<i64: 3, 128>}, {transform_indices = @transform_6, window_bounds = array<i64: 1, 128>}]} {
    %c0 = arith.constant 0 : index
    %c0_0 = arith.constant 0 : index
    %0 = vector.load %arg2[%c0, %c0_0] : memref<32x2xf32, #tpu.memory_space<vmem>>, vector<32x2xf32>
    %c0_1 = arith.constant 0 : index
    %c0_2 = arith.constant 0 : index
    %1 = vector.load %arg1[%c0_1, %c0_2] : memref<2x128xf32, #tpu.memory_space<vmem>>, vector<2x128xf32>
    %cst = arith.constant dense<0.000000e+00> : vector<32x128xf32>
    %2 = tpu.matmul %0, %1, %cst {dimension_numbers = #tpu.dot_dimension_numbers<[1], [0], [0], [1], [0, 0, 1, 1], [], []>} : vector<32x2xf32>, vector<2x128xf32>, vector<32x128xf32> -> vector<32x128xf32>
    %c0_3 = arith.constant 0 : index
    %c0_4 = arith.constant 0 : index
    %3 = vector.load %arg3[%c0_3, %c0_4] : memref<32x1xf32, #tpu.memory_space<vmem>>, vector<32x1xf32>
    %4 = vector.broadcast %3 : vector<32x1xf32> to vector<32x128xf32>
    %5 = arith.addf %2, %4 : vector<32x128xf32>
    %cst_5 = arith.constant 0.000000e+00 : f32
    %6 = vector.broadcast %cst_5 : f32 to vector<32x128xf32>
    %7 = arith.maximumf %5, %6 : vector<32x128xf32>
    %c0_6 = arith.constant 0 : index
    %c0_7 = arith.constant 0 : index
    %8 = vector.load %arg4[%c0_6, %c0_7] : memref<4x32xf32, #tpu.memory_space<vmem>>, vector<4x32xf32>
    %cst_8 = arith.constant dense<0.000000e+00> : vector<4x128xf32>
    %9 = tpu.matmul %8, %7, %cst_8 {dimension_numbers = #tpu.dot_dimension_numbers<[1], [0], [0], [1], [0, 0, 1, 1], [], []>} : vector<4x32xf32>, vector<32x128xf32>, vector<4x128xf32> -> vector<4x128xf32>
    %c0_9 = arith.constant 0 : index
    %c0_10 = arith.constant 0 : index
    %10 = vector.load %arg5[%c0_9, %c0_10] : memref<4x1xf32, #tpu.memory_space<vmem>>, vector<4x1xf32>
    %11 = vector.broadcast %10 : vector<4x1xf32> to vector<4x128xf32>
    %12 = arith.addf %9, %11 : vector<4x128xf32>
    %13 = vector.extract_strided_slice %12 {offsets = [0, 0], sizes = [3, 128], strides = [1, 1]} : vector<4x128xf32> to vector<3x128xf32>
    %c0_11 = arith.constant 0 : index
    %c0_12 = arith.constant 0 : index
    %14 = vector.load %arg6[%c0_11, %c0_12] : memref<3x128xf32, #tpu.memory_space<vmem>>, vector<3x128xf32>
    tpu.vector_store %arg6[%c0_11, %c0_12], %13 {strides = array<i32>} : memref<3x128xf32, #tpu.memory_space<vmem>>, vector<3x128xf32>,
    %15 = vector.extract_strided_slice %12 {offsets = [3, 0], sizes = [1, 128], strides = [1, 1]} : vector<4x128xf32> to vector<1x128xf32>
    %c0_13 = arith.constant 0 : index
    %c0_14 = arith.constant 0 : index
    %16 = vector.load %arg7[%c0_13, %c0_14] : memref<1x128xf32, #tpu.memory_space<vmem>>, vector<1x128xf32>
    tpu.vector_store %arg7[%c0_13, %c0_14], %15 {strides = array<i32>} : memref<1x128xf32, #tpu.memory_space<vmem>>, vector<1x128xf32>,
    return
  }
  func.func @transform_0(%arg0: i32) -> (i32, i32) {
    %c0_i32 = arith.constant 0 : i32
    %c0_i32_0 = arith.constant 0 : i32
    return %c0_i32, %arg0 : i32, i32
  }
  func.func @transform_1(%arg0: i32) -> (i32, i32) {
    %c0_i32 = arith.constant 0 : i32
    %c0_i32_0 = arith.constant 0 : i32
    %c0_i32_1 = arith.constant 0 : i32
    return %c0_i32, %c0_i32_0 : i32, i32
  }
  func.func @transform_2(%arg0: i32) -> (i32, i32) {
    %c0_i32 = arith.constant 0 : i32
    %c0_i32_0 = arith.constant 0 : i32
    %c0_i32_1 = arith.constant 0 : i32
    return %c0_i32, %c0_i32_0 : i32, i32
  }
  func.func @transform_3(%arg0: i32) -> (i32, i32) {
    %c0_i32 = arith.constant 0 : i32
    %c0_i32_0 = arith.constant 0 : i32
    %c0_i32_1 = arith.constant 0 : i32
    return %c0_i32, %c0_i32_0 : i32, i32
  }
  func.func @transform_4(%arg0: i32) -> (i32, i32) {
    %c0_i32 = arith.constant 0 : i32
    %c0_i32_0 = arith.constant 0 : i32
    %c0_i32_1 = arith.constant 0 : i32
    return %c0_i32, %c0_i32_0 : i32, i32
  }
  func.func @transform_5(%arg0: i32) -> (i32, i32) {
    %c0_i32 = arith.constant 0 : i32
    %c0_i32_0 = arith.constant 0 : i32
    return %c0_i32, %arg0 : i32, i32
  }
  func.func @transform_6(%arg0: i32) -> (i32, i32) {
    %c0_i32 = arith.constant 0 : i32
    %c0_i32_0 = arith.constant 0 : i32
    return %c0_i32, %arg0 : i32, i32
  }
}

</mosaic_0001>

<llo_original>
// kernel: tpu_custom_call.1
$region0: #{tpu_custom_call.1}
  #allocation0 [shape = 'u32[]', space=smem, size = 0x4, offset = 0x4, fixed_abs, tag = 'smem constant byte address 0x4 - core index']
  #allocation1 [shape = 'u32[144,128]{1,0:T(1,128)}', space=vmem, size = 0x12000, scoped, tag = 'internal scratch']
  %s0 = inlined_call_operand.vmem [shape: f32[2,256], index: 0, kind: input, shape index: {}]
  %s1 = inlined_call_operand.vmem [shape: f32[32,2], index: 1, kind: input, shape index: {}]
  %s2 = inlined_call_operand.vmem [shape: f32[32,1], index: 2, kind: input, shape index: {}]
  %s3 = inlined_call_operand.vmem [shape: f32[4,32], index: 3, kind: input, shape index: {}]
  %s4 = inlined_call_operand.vmem [shape: f32[4,1], index: 4, kind: input, shape index: {}]
  %s5 = inlined_call_operand.hbm [shape: f32[3,256], index: 5, kind: output, shape index: {0}]
  %s6 = inlined_call_operand.hbm [shape: f32[1,256], index: 6, kind: output, shape index: {1}]
  %7 = xla_tuple %s5, %s6
  %s8 = sld [smem:[#allocation0]]
  $region61: #{tpu_custom_call.1} parent=0
    _
  %s10 = ssub.s32 1, %s8
  %s11 = scalar_select 0, %s10, %s8
  $region1: #{tpu_custom_call.1} parent=0
    #allocation2 [shape = 'u8[4096]{0}', space=vmem, size = 0x1000, scoped, tag = 'output window, operand 0']
    #allocation3 [shape = 's32[2]{0}', space=sflag, size = 0x8, scoped, tag = 'scoped memory for tpu_custom_call.1']
    #allocation4 [shape = 'u8[1024]{0}', space=vmem, size = 0x400, scoped, tag = 'output window, operand 1']
    #allocation5 [shape = 's32[2]{0}', space=sflag, size = 0x8, scoped, tag = 'scoped memory for tpu_custom_call.1']
    %12 = vsyncpa [#allocation3], 0
    %s13 = scalar_lea.sflag [#allocation3], 1
    %14 = vsyncpa %s13, 0
    %15 = vsyncpa [#allocation5], 0
    %s16 = scalar_lea.sflag [#allocation5], 1
    %17 = vsyncpa %s16, 0
    loop: start=0, step=1, limit=4
    $region2: #{tpu_custom_call.1} parent=1 // loop_pre_header
      _
    $region3: #{tpu_custom_call.1} parent=1 // loop_header
      %s19 = sphi 0, %s23
      %p20 = scmp.ge.s32.totalorder %s19, 4
      %s29 = sphi 0, %s31
      %s32 = sphi 0, %s29
      %s33 = sphi 0, %s32
      %s49 = sphi 0, %s33
      %s53 = sphi 0, %s53
      %s55 = sphi 0, %s53
      %s56 = sphi 0, %s55
      %s70 = sphi 0, %s56
      %s74 = sphi 0, %s74
      %s76 = sphi 0, %s74
      %s77 = sphi 0, %s76
      %s91 = sphi 0, %s77
      %s95 = sphi 0, %s95
      %s97 = sphi 0, %s95
      %s98 = sphi 0, %s97
      %s112 = sphi 0, %s98
      %s116 = sphi 0, %s116
      %s118 = sphi 0, %s116
      %s119 = sphi 0, %s118
      %s133 = sphi 0, %s119
      %s139 = sphi 0, %s141
      %s142 = sphi 0, %s139
      %s143 = sphi 0, %s142
      %s159 = sphi 0, %s143
      %s165 = sphi 0, %s167
      %s168 = sphi 0, %s165
      %s169 = sphi 0, %s168
      %s185 = sphi 0, %s169
    $region4: #{tpu_custom_call.1} parent=1 // loop_header_branch
      %22 = sbr.rel (%p20) target = $region8
    $region5: #{tpu_custom_call.1} parent=1 // loop_body
      %s24 = ssub.s32 %s19, 1
      %s25 = ssub.s32 %s19, 2
      %s26 = sadd.s32 %s19, 1
      %s27 = ssub.s32 %s19, %s26
      %p28 = scmp.eq.s32.totalorder %s27, 0
      %s30 = sadd.s32 %s29, 1
      %s31 = scalar_select %p28, %s29, %s30
      %p34 = pneg %p28
      %p35 = scmp.eq.s32.totalorder %s19, 1
      %p36 = por %p34, %p35
      %p37 = scmp.ne.s32.totalorder %s29, %s32
      %p38 = scmp.eq.s32.totalorder %s19, 0
      %p39 = por %p37, %p38
      %p40 = scmp.ne.s32.totalorder %s29, %s32
      %p41 = scmp.eq.s32.totalorder %s24, 1
      %p42 = por %p40, %p41
      %p43 = scmp.ne.s32.totalorder %s32, %s33
      %p44 = scmp.eq.s32.totalorder %s24, 0
      %p45 = por %p43, %p44
      %p46 = scmp.ne.s32.totalorder %s32, %s33
      %p47 = scmp.eq.s32.totalorder %s25, 1
      %p48 = por %p46, %p47
      %p50 = scmp.ne.s32.totalorder %s33, %s49
      %p51 = scmp.eq.s32.totalorder %s25, 0
      %p52 = por %p50, %p51
      %s54 = sadd.s32 %s53, 1
      %p57 = scmp.eq.s32.totalorder %s19, 1
      %p58 = scmp.ne.s32.totalorder %s53, %s55
      %p59 = scmp.eq.s32.totalorder %s19, 0
      %p60 = por %p58, %p59
      %p61 = scmp.ne.s32.totalorder %s53, %s55
      %p62 = scmp.eq.s32.totalorder %s24, 1
      %p63 = por %p61, %p62
      %p64 = scmp.ne.s32.totalorder %s55, %s56
      %p65 = scmp.eq.s32.totalorder %s24, 0
      %p66 = por %p64, %p65
      %p67 = scmp.ne.s32.totalorder %s55, %s56
      %p68 = scmp.eq.s32.totalorder %s25, 1
      %p69 = por %p67, %p68
      %p71 = scmp.ne.s32.totalorder %s56, %s70
      %p72 = scmp.eq.s32.totalorder %s25, 0
      %p73 = por %p71, %p72
      %s75 = sadd.s32 %s74, 1
      %p78 = scmp.eq.s32.totalorder %s19, 1
      %p79 = scmp.ne.s32.totalorder %s74, %s76
      %p80 = scmp.eq.s32.totalorder %s19, 0
      %p81 = por %p79, %p80
      %p82 = scmp.ne.s32.totalorder %s74, %s76
      %p83 = scmp.eq.s32.totalorder %s24, 1
      %p84 = por %p82, %p83
      %p85 = scmp.ne.s32.totalorder %s76, %s77
      %p86 = scmp.eq.s32.totalorder %s24, 0
      %p87 = por %p85, %p86
      %p88 = scmp.ne.s32.totalorder %s76, %s77
      %p89 = scmp.eq.s32.totalorder %s25, 1
      %p90 = por %p88, %p89
      %p92 = scmp.ne.s32.totalorder %s77, %s91
      %p93 = scmp.eq.s32.totalorder %s25, 0
      %p94 = por %p92, %p93
      %s96 = sadd.s32 %s95, 1
      %p99 = scmp.eq.s32.totalorder %s19, 1
      %p100 = scmp.ne.s32.totalorder %s95, %s97
      %p101 = scmp.eq.s32.totalorder %s19, 0
      %p102 = por %p100, %p101
      %p103 = scmp.ne.s32.totalorder %s95, %s97
      %p104 = scmp.eq.s32.totalorder %s24, 1
      %p105 = por %p103, %p104
      %p106 = scmp.ne.s32.totalorder %s97, %s98
      %p107 = scmp.eq.s32.totalorder %s24, 0
      %p108 = por %p106, %p107
      %p109 = scmp.ne.s32.totalorder %s97, %s98
      %p110 = scmp.eq.s32.totalorder %s25, 1
      %p111 = por %p109, %p110
      %p113 = scmp.ne.s32.totalorder %s98, %s112
      %p114 = scmp.eq.s32.totalorder %s25, 0
      %p115 = por %p113, %p114
      %s117 = sadd.s32 %s116, 1
      %p120 = scmp.eq.s32.totalorder %s19, 1
      %p121 = scmp.ne.s32.totalorder %s116, %s118
      %p122 = scmp.eq.s32.totalorder %s19, 0
      %p123 = por %p121, %p122
      %p124 = scmp.ne.s32.totalorder %s116, %s118
      %p125 = scmp.eq.s32.totalorder %s24, 1
      %p126 = por %p124, %p125
      %p127 = scmp.ne.s32.totalorder %s118, %s119
      %p128 = scmp.eq.s32.totalorder %s24, 0
      %p129 = por %p127, %p128
      %p130 = scmp.ne.s32.totalorder %s118, %s119
      %p131 = scmp.eq.s32.totalorder %s25, 1
      %p132 = por %p130, %p131
      %p134 = scmp.ne.s32.totalorder %s119, %s133
      %p135 = scmp.eq.s32.totalorder %s25, 0
      %p136 = por %p134, %p135
      %s137 = ssub.s32 %s19, %s26
      %p138 = scmp.eq.s32.totalorder %s137, 0
      %s140 = sadd.s32 %s139, 1
      %s141 = scalar_select %p138, %s139, %s140
      %p144 = pneg %p138
      %p145 = scmp.eq.s32.totalorder %s19, 1
      %p146 = por %p144, %p145
      %p147 = scmp.ne.s32.totalorder %s139, %s142
      %p148 = scmp.eq.s32.totalorder %s19, 0
      %p149 = por %p147, %p148
      %p150 = scmp.ne.s32.totalorder %s139, %s142
      %p151 = scmp.eq.s32.totalorder %s24, 1
      %p152 = por %p150, %p151
      %p153 = scmp.ne.s32.totalorder %s142, %s143
      %p154 = scmp.eq.s32.totalorder %s24, 0
      %p155 = por %p153, %p154
      %p156 = scmp.ne.s32.totalorder %s142, %s143
      %p157 = scmp.eq.s32.totalorder %s25, 1
      %p158 = por %p156, %p157
      %p160 = scmp.ne.s32.totalorder %s143, %s159
      %p161 = scmp.eq.s32.totalorder %s25, 0
      %p162 = por %p160, %p161
      %s163 = ssub.s32 %s19, %s26
      %p164 = scmp.eq.s32.totalorder %s163, 0
      %s166 = sadd.s32 %s165, 1
      %s167 = scalar_select %p164, %s165, %s166
      %p170 = pneg %p164
      %p171 = scmp.eq.s32.totalorder %s19, 1
      %p172 = por %p170, %p171
      %p173 = scmp.ne.s32.totalorder %s165, %s168
      %p174 = scmp.eq.s32.totalorder %s19, 0
      %p175 = por %p173, %p174
      %p176 = scmp.ne.s32.totalorder %s165, %s168
      %p177 = scmp.eq.s32.totalorder %s24, 1
      %p178 = por %p176, %p177
      %p179 = scmp.ne.s32.totalorder %s168, %s169
      %p180 = scmp.eq.s32.totalorder %s24, 0
      %p181 = por %p179, %p180
      %p182 = scmp.ne.s32.totalorder %s168, %s169
      %p183 = scmp.eq.s32.totalorder %s25, 1
      %p184 = por %p182, %p183
      %p186 = scmp.ne.s32.totalorder %s169, %s185
      %p187 = scmp.eq.s32.totalorder %s25, 0
      %p188 = por %p186, %p187
      %p189 = scmp.le.s32.totalorder 1, %s19
      %p190 = scmp.lt.s32.totalorder %s19, 3
      %p191 = pnand %p189, %p190
      %p192 = pneg %p191
      // Predicated region
      $region9: #{tpu_custom_call.1} parent=5 // pred_check
        _
      $region10: #{tpu_custom_call.1} parent=5 // pred_check_branch
        %194 = sbr.rel (%p191) target = $region12
      $region11: #{tpu_custom_call.1} parent=5 // pred_region
        %s195 = ssub.s32 %s19, 1
        // Predicated region
        $region13: #{tpu_custom_call.1} parent=11 // pred_check
          %p196 = pneg %p66
        $region14: #{tpu_custom_call.1} parent=11 // pred_check_branch
          %198 = sbr.rel (%p196) target = $region16
        $region15: #{tpu_custom_call.1} parent=11 // pred_region
          _
        $region16: #{tpu_custom_call.1} parent=11 // pred_fallthru
          _
        // Predicated region
        $region17: #{tpu_custom_call.1} parent=11 // pred_check
          %p199 = pneg %p87
        $region18: #{tpu_custom_call.1} parent=11 // pred_check_branch
          %201 = sbr.rel (%p199) target = $region20
        $region19: #{tpu_custom_call.1} parent=11 // pred_region
          _
        $region20: #{tpu_custom_call.1} parent=11 // pred_fallthru
          _
        // Predicated region
        $region21: #{tpu_custom_call.1} parent=11 // pred_check
          %p202 = pneg %p108
        $region22: #{tpu_custom_call.1} parent=11 // pred_check_branch
          %204 = sbr.rel (%p202) target = $region24
        $region23: #{tpu_custom_call.1} parent=11 // pred_region
          _
        $region24: #{tpu_custom_call.1} parent=11 // pred_fallthru
          _
        // Predicated region
        $region25: #{tpu_custom_call.1} parent=11 // pred_check
          %p205 = pneg %p129
        $region26: #{tpu_custom_call.1} parent=11 // pred_check_branch
          %207 = sbr.rel (%p205) target = $region28
        $region27: #{tpu_custom_call.1} parent=11 // pred_region
          _
        $region28: #{tpu_custom_call.1} parent=11 // pred_fallthru
          _
      $region12: #{tpu_custom_call.1} parent=5 // pred_fallthru
        _
      %p208 = scmp.lt.s32.totalorder %s19, 2
      // Predicated region
      $region29: #{tpu_custom_call.1} parent=5 // pred_check
        %p209 = pneg %p208
      $region30: #{tpu_custom_call.1} parent=5 // pred_check_branch
        %211 = sbr.rel (%p209) target = $region32
      $region31: #{tpu_custom_call.1} parent=5 // pred_region
        // Predicated region
        $region33: #{tpu_custom_call.1} parent=31 // pred_check
          %p212 = pneg %p39
        $region34: #{tpu_custom_call.1} parent=31 // pred_check_branch
          %214 = sbr.rel (%p212) target = $region36
        $region35: #{tpu_custom_call.1} parent=31 // pred_region
          %p215 = scmp.lt.s32.totalorder %s19, 1
          %s216 = scalar_select %p215, %s19, 1
          %s217 = smul.addr %s216, 2
          %s218 = scalar_lea.vmem %s0, %s217
        $region36: #{tpu_custom_call.1} parent=31 // pred_fallthru
          _
      $region32: #{tpu_custom_call.1} parent=5 // pred_fallthru
        _
      %p219 = scmp.le.s32.totalorder 1, %s19
      %p220 = scmp.lt.s32.totalorder %s19, 3
      %p221 = pnand %p219, %p220
      %p222 = pneg %p221
      // Predicated region
      $region37: #{tpu_custom_call.1} parent=5 // pred_check
        _
      $region38: #{tpu_custom_call.1} parent=5 // pred_check_branch
        %224 = sbr.rel (%p221) target = $region40
      $region39: #{tpu_custom_call.1} parent=5 // pred_region
        %s225 = ssub.s32 %s19, 1
        %p226 = scmp.lt.s32.totalorder %s24, 1
        %s227 = scalar_select %p226, %s24, 1
        %s228 = smul.addr %s227, 2
        %s229 = scalar_lea.vmem %s0, %s228
        %p230 = pneg %p45
        %p231 = pneg %p42
        %p232 = pneg %p66
        %p233 = pneg %p63
        %p234 = pneg %p87
        %p235 = pneg %p84
        %p236 = pneg %p108
        %p237 = pneg %p105
        %p238 = pneg %p129
        %p239 = pneg %p126
        %p240 = pneg %p155
        %p241 = pneg %p152
        %s242 = sand.u32 %s142, 1
        %s243 = scalar_lea.sflag [#allocation3], %s242
        %s244 = sand.u32 %s142, 1
        %s245 = smul.addr %s244, 4
        %s246 = scalar_lea.vmem [#allocation2], %s245
        %p247 = pneg %p181
        %p248 = pneg %p178
        %s249 = sand.u32 %s168, 1
        %s250 = scalar_lea.sflag [#allocation5], %s249
        %s251 = sand.u32 %s168, 1
        %s252 = scalar_lea.vmem [#allocation4], %s251
        %p253 = scmp.lt.s32.totalorder %s24, 1
        %s254 = scalar_select %p253, %s24, 1
        %s255 = smul.addr %s254, 2
        %s256 = scalar_lea.vmem %s0, %s255
        %v257 = vld [vmem:[%s1] sm:$0xff]
        %v258 = vld [vmem:[%s1 + $0x8] sm:$0xff]
        %v259 = vld [vmem:[%s1 + $0x10] sm:$0xff]
        %v260 = vld [vmem:[%s1 + $0x18] sm:$0xff]
        %v261 = vld [vmem:[%s256] sm:$0x3]
        %v262 = vld [vmem:[%s2] sm:$0xff]
        %v263 = vld [vmem:[%s2 + $0x8] sm:$0xff]
        %v264 = vld [vmem:[%s2 + $0x10] sm:$0xff]
        %v265 = vld [vmem:[%s2 + $0x18] sm:$0xff]
        %267 = vset.pattern.permute.xlu0 0
        %268 = vperm.xlu0 %267, %v262
        %v269 = vpop.permute.xlu0 %268
        %272 = vset.pattern.permute.xlu0 0
        %273 = vperm.xlu0 %272, %v263
        %v274 = vpop.permute.xlu0 %273
        %277 = vset.pattern.permute.xlu0 0
        %278 = vperm.xlu0 %277, %v264
        %v279 = vpop.permute.xlu0 %278
        %282 = vset.pattern.permute.xlu0 0
        %283 = vperm.xlu0 %282, %v265
        %v284 = vpop.permute.xlu0 %283
        %vm286 = vcmask 15360
        %v288 = vsel %vm286, %v257, 0
        %v291 = vsel %vm286, %v258, 0
        %v294 = vsel %vm286, %v259, 0
        %v297 = vsel %vm286, %v260, 0
        %vm299 = vcmask 1041408
        %v301 = vsel %vm299, %v261, 0
        %303 = vmatprep.subr.mxu0 0.0
        %304 = vmatpush1.msra.mxu0 %v301
        %305 = vmatprep.subr.mxu0 0.0
        %306 = vmatpush1.msra.mxu0 0.0
        %307 = vmatprep.subr.mxu0 0.0
        %308 = vmatpush1.msra.mxu0 0.0
        %309 = vmatprep.subr.mxu0 0.0
        %310 = vmatpush1.msra.mxu0 0.0
        %311 = vmatprep.subr.mxu0 0.0
        %312 = vmatpush1.msra.mxu0 0.0
        %313 = vmatprep.subr.mxu0 0.0
        %314 = vmatpush1.msra.mxu0 0.0
        %315 = vmatprep.subr.mxu0 0.0
        %316 = vmatpush1.msra.mxu0 0.0
        %317 = vmatprep.subr.mxu0 0.0
        %318 = vmatpush1.msra.mxu0 0.0
        %319 = vmatprep.subr.mxu0 0.0
        %320 = vmatpush1.msra.mxu0 0.0
        %321 = vmatprep.subr.mxu0 0.0
        %322 = vmatpush1.msra.mxu0 0.0
        %323 = vmatprep.subr.mxu0 0.0
        %324 = vmatpush1.msra.mxu0 0.0
        %325 = vmatprep.subr.mxu0 0.0
        %326 = vmatpush1.msra.mxu0 0.0
        %327 = vmatprep.subr.mxu0 0.0
        %328 = vmatpush1.msra.mxu0 0.0
        %329 = vmatprep.subr.mxu0 0.0
        %330 = vmatpush1.msra.mxu0 0.0
        %331 = vmatprep.subr.mxu0 0.0
        %332 = vmatpush1.msra.mxu0 0.0
        %333 = vmatprep.subr.mxu0 0.0
        %334 = vmatpush1.msra.mxu0 0.0
        %335 = vmatprep.subr.mxu0 0.0
        %336 = vmatpush1.msra.mxu0 0.0
        %337 = vmatprep.subr.mxu0 0.0
        %338 = vmatpush1.msra.mxu0 0.0
        %339 = vmatprep.subr.mxu0 0.0
        %340 = vmatpush1.msra.mxu0 0.0
        %341 = vmatprep.subr.mxu0 0.0
        %342 = vmatpush1.msra.mxu0 0.0
        %343 = vmatprep.subr.mxu0 0.0
        %344 = vmatpush1.msra.mxu0 0.0
        %345 = vmatprep.subr.mxu0 0.0
        %346 = vmatpush1.msra.mxu0 0.0
        %347 = vmatprep.subr.mxu0 0.0
        %348 = vmatpush1.msra.mxu0 0.0
        %349 = vmatprep.subr.mxu0 0.0
        %350 = vmatpush1.msra.mxu0 0.0
        %351 = vmatprep.subr.mxu0 0.0
        %352 = vmatpush1.msra.mxu0 0.0
        %353 = vmatprep.subr.mxu0 0.0
        %354 = vmatpush1.msra.mxu0 0.0
        %355 = vmatprep.subr.mxu0 0.0
        %356 = vmatpush1.msra.mxu0 0.0
        %357 = vmatprep.subr.mxu0 0.0
        %358 = vmatpush1.msra.mxu0 0.0
        %359 = vmatprep.subr.mxu0 0.0
        %360 = vmatpush1.msra.mxu0 0.0
        %361 = vmatprep.subr.mxu0 0.0
        %362 = vmatpush1.msra.mxu0 0.0
        %363 = vmatprep.subr.mxu0 0.0
        %364 = vmatpush1.msra.mxu0 0.0
        %365 = vmatprep.subr.mxu0 0.0
        %366 = vmatpush1.msra.mxu0 0.0
        %367 = vmatprep.mubr.f32.mxu0 0.0
        %368 = vmatmul.mubr.f32.gmra.mrb[0].mxu0 %v288
        %v369 = vpop.f32.mrb[0].mxu0
        %v370 = vadd.f32 %v269, %v369
        %v371 = vpop.f32.mrb[0].mxu0
        %372 = vmatprep.mubr.f32.mxu0 0.0
        %373 = vmatmul.mubr.f32.gmra.mrb[0].mxu0 %v291
        %v374 = vpop.f32.mrb[0].mxu0
        %v375 = vadd.f32 %v274, %v374
        %v376 = vpop.f32.mrb[0].mxu0
        %377 = vmatprep.mubr.f32.mxu0 0.0
        %378 = vmatmul.mubr.f32.gmra.mrb[0].mxu0 %v294
        %v379 = vpop.f32.mrb[0].mxu0
        %v380 = vadd.f32 %v279, %v379
        %v381 = vpop.f32.mrb[0].mxu0
        %382 = vmatprep.mubr.f32.mxu0 0.0
        %383 = vmatmul.mubr.f32.gmra.mrb[0].mxu0 %v297
        %v384 = vpop.f32.mrb[0].mxu0
        %v385 = vadd.f32 %v284, %v384
        %v386 = vpop.f32.mrb[0].mxu0
        %387 = vdwg.mxu0
        %v388 = vmax.f32 %v370, 0.0
        %v389 = vmax.f32 %v375, 0.0
        %v390 = vmax.f32 %v380, 0.0
        %v391 = vmax.f32 %v385, 0.0
        %v392 = vld [vmem:[%s3] sm:$0xf]
        %v393 = vld [vmem:[%s4] sm:$0xf]
        %395 = vset.pattern.permute.xlu0 0
        %396 = vperm.xlu0 %395, %v393
        %v397 = vpop.permute.xlu0 %396
        %vm399 = vcmask 261120
        %v401 = vsel %vm399, %v392, 0
        %403 = vmatprep.subr.mxu0 0.0
        %404 = vmatpush1.msra.mxu0 %v388
        %405 = vmatprep.subr.mxu0 0.0
        %406 = vmatpush1.msra.mxu0 %v389
        %407 = vmatprep.subr.mxu0 0.0
        %408 = vmatpush1.msra.mxu0 %v390
        %409 = vmatprep.subr.mxu0 0.0
        %410 = vmatpush1.msra.mxu0 %v391
        %411 = vmatprep.subr.mxu0 0.0
        %412 = vmatpush1.msra.mxu0 0.0
        %413 = vmatprep.subr.mxu0 0.0
        %414 = vmatpush1.msra.mxu0 0.0
        %415 = vmatprep.subr.mxu0 0.0
        %416 = vmatpush1.msra.mxu0 0.0
        %417 = vmatprep.subr.mxu0 0.0
        %418 = vmatpush1.msra.mxu0 0.0
        %419 = vmatprep.subr.mxu0 0.0
        %420 = vmatpush1.msra.mxu0 0.0
        %421 = vmatprep.subr.mxu0 0.0
        %422 = vmatpush1.msra.mxu0 0.0
        %423 = vmatprep.subr.mxu0 0.0
        %424 = vmatpush1.msra.mxu0 0.0
        %425 = vmatprep.subr.mxu0 0.0
        %426 = vmatpush1.msra.mxu0 0.0
        %427 = vmatprep.subr.mxu0 0.0
        %428 = vmatpush1.msra.mxu0 0.0
        %429 = vmatprep.subr.mxu0 0.0
        %430 = vmatpush1.msra.mxu0 0.0
        %431 = vmatprep.subr.mxu0 0.0
        %432 = vmatpush1.msra.mxu0 0.0
        %433 = vmatprep.subr.mxu0 0.0
        %434 = vmatpush1.msra.mxu0 0.0
        %435 = vmatprep.subr.mxu0 0.0
        %436 = vmatpush1.msra.mxu0 0.0
        %437 = vmatprep.subr.mxu0 0.0
        %438 = vmatpush1.msra.mxu0 0.0
        %439 = vmatprep.subr.mxu0 0.0
        %440 = vmatpush1.msra.mxu0 0.0
        %441 = vmatprep.subr.mxu0 0.0
        %442 = vmatpush1.msra.mxu0 0.0
        %443 = vmatprep.subr.mxu0 0.0
        %444 = vmatpush1.msra.mxu0 0.0
        %445 = vmatprep.subr.mxu0 0.0
        %446 = vmatpush1.msra.mxu0 0.0
        %447 = vmatprep.subr.mxu0 0.0
        %448 = vmatpush1.msra.mxu0 0.0
        %449 = vmatprep.subr.mxu0 0.0
        %450 = vmatpush1.msra.mxu0 0.0
        %451 = vmatprep.subr.mxu0 0.0
        %452 = vmatpush1.msra.mxu0 0.0
        %453 = vmatprep.subr.mxu0 0.0
        %454 = vmatpush1.msra.mxu0 0.0
        %455 = vmatprep.subr.mxu0 0.0
        %456 = vmatpush1.msra.mxu0 0.0
        %457 = vmatprep.subr.mxu0 0.0
        %458 = vmatpush1.msra.mxu0 0.0
        %459 = vmatprep.subr.mxu0 0.0
        %460 = vmatpush1.msra.mxu0 0.0
        %461 = vmatprep.subr.mxu0 0.0
        %462 = vmatpush1.msra.mxu0 0.0
        %463 = vmatprep.subr.mxu0 0.0
        %464 = vmatpush1.msra.mxu0 0.0
        %465 = vmatprep.subr.mxu0 0.0
        %466 = vmatpush1.msra.mxu0 0.0
        %467 = vmatprep.mubr.f32.mxu0 0.0
        %468 = vmatmul.mubr.f32.gmra.mrb[0].mxu0 %v401
        %v469 = vpop.f32.mrb[0].mxu0
        %v470 = vadd.f32 %v397, %v469
        %v471 = vpop.f32.mrb[0].mxu0
        %472 = vdwg.mxu0
        %473 = vst [vmem:[%s246] sm:$0x7] %v470
        %474 = vst [vmem:[%s252 - $0x3] sm:$0x8] %v470
        %s475 = sand.u32 %s142, 1
        %s476 = scalar_lea.sflag [#allocation3], %s475
        %s477 = sand.u32 %s142, 1
        %s478 = smul.addr %s477, 4
        %s479 = scalar_lea.vmem [#allocation2], %s478
        %s480 = sand.u32 %s168, 1
        %s481 = scalar_lea.sflag [#allocation5], %s480
        %s482 = sand.u32 %s168, 1
        %s483 = scalar_lea.vmem [#allocation4], %s482
        // Predicated region
        $region41: #{tpu_custom_call.1} parent=39 // pred_check
          %p484 = pneg %p152
        $region42: #{tpu_custom_call.1} parent=39 // pred_check_branch
          %486 = sbr.rel (%p484) target = $region44
        $region43: #{tpu_custom_call.1} parent=39 // pred_region
          %s488 = ssub.s32 64, 64
          %489 = vsyncadd %s476, %s488
          %s490 = smul.addr %s24, 64
          %s491 = scalar_lea.hbm %s5, %s490
          %s493 = sshll.u32 %s479, 4
          %s494 = int_to_ptr.vmem [resolvable:$true] %s493
          %496 = dma.vmem_to_hbm [thread:$0]  %s494, 64, %s491, %s476
        $region44: #{tpu_custom_call.1} parent=39 // pred_fallthru
          _
        // Predicated region
        $region45: #{tpu_custom_call.1} parent=39 // pred_check
          %p497 = pneg %p178
        $region46: #{tpu_custom_call.1} parent=39 // pred_check_branch
          %499 = sbr.rel (%p497) target = $region48
        $region47: #{tpu_custom_call.1} parent=39 // pred_region
          %s501 = ssub.s32 16, 16
          %502 = vsyncadd %s481, %s501
          %s503 = smul.addr %s24, 16
          %s504 = scalar_lea.hbm %s6, %s503
          %s506 = sshll.u32 %s483, 4
          %s507 = int_to_ptr.vmem [resolvable:$true] %s506
          %509 = dma.vmem_to_hbm [thread:$0]  %s507, 16, %s504, %s481
        $region48: #{tpu_custom_call.1} parent=39 // pred_fallthru
          _
      $region40: #{tpu_custom_call.1} parent=5 // pred_fallthru
        _
      %p510 = scmp.le.s32.totalorder 2, %s19
      // Predicated region
      $region49: #{tpu_custom_call.1} parent=5 // pred_check
        %p511 = pneg %p510
      $region50: #{tpu_custom_call.1} parent=5 // pred_check_branch
        %513 = sbr.rel (%p511) target = $region52
      $region51: #{tpu_custom_call.1} parent=5 // pred_region
        %s514 = ssub.s32 %s19, 2
        // Predicated region
        $region53: #{tpu_custom_call.1} parent=51 // pred_check
          %p515 = pneg %p158
        $region54: #{tpu_custom_call.1} parent=51 // pred_check_branch
          %517 = sbr.rel (%p515) target = $region56
        $region55: #{tpu_custom_call.1} parent=51 // pred_region
          %s518 = sand.u32 %s143, 1
          %s519 = scalar_lea.sflag [#allocation3], %s518
          %s520 = sand.u32 %s143, 1
          %s521 = smul.addr %s520, 4
          %s522 = scalar_lea.vmem [#allocation2], %s521
          %523 = dma.done %s519, 64
        $region56: #{tpu_custom_call.1} parent=51 // pred_fallthru
          _
        // Predicated region
        $region57: #{tpu_custom_call.1} parent=51 // pred_check
          %p524 = pneg %p184
        $region58: #{tpu_custom_call.1} parent=51 // pred_check_branch
          %526 = sbr.rel (%p524) target = $region60
        $region59: #{tpu_custom_call.1} parent=51 // pred_region
          %s527 = sand.u32 %s169, 1
          %s528 = scalar_lea.sflag [#allocation5], %s527
          %s529 = sand.u32 %s169, 1
          %s530 = scalar_lea.vmem [#allocation4], %s529
          %531 = dma.done %s528, 16
        $region60: #{tpu_custom_call.1} parent=51 // pred_fallthru
          _
      $region52: #{tpu_custom_call.1} parent=5 // pred_fallthru
        _
    $region6: #{tpu_custom_call.1} parent=1 // loop_footer
      %s23 = sadd.s32 1, %s19
    $region7: #{tpu_custom_call.1} parent=1 // loop_footer_branch
      %18 = sbr.rel target = $region3
    $region8: #{tpu_custom_call.1} parent=1 // loop_exit
      _
    %532 = vsyncpa [#allocation3], 1
    %s533 = scalar_lea.sflag [#allocation3], 1
    %534 = vsyncpa %s533, 1
    %535 = vsyncpa [#allocation5], 1
    %s536 = scalar_lea.sflag [#allocation5], 1
    %537 = vsyncpa %s536, 1

</llo_original>
